<compile_context>
chip_gen: v7x
topology: tpu7x:2x2x1
jax: 0.10.0
libtpu: 0.0.40
codegen_flags: <defaults>
</compile_context>

<pallas_src>
import jax
import jax.numpy as jnp
from jax import lax
from jax.experimental import pallas as pl
from jax.experimental.pallas import tpu as pltpu

AUDIO_DIM = 256   # WavLM_Base_MHFA embed_dim
IMAGE_DIM = 512   # InceptionResnetV1 embedding dim
OUT_DIM = 512     # MeanSoftAttentionFusion out_dim
EPS = 1e-12       # torch F.normalize default eps


# ----------------------------------------------------------------------------
# Pallas kernel: MeanSoftAttentionFusion forward (one batch tile per grid step)
# ----------------------------------------------------------------------------
def fusion_kernel(audio_ref,   # (TB, 256)
                  video_ref,   # (TB, 512)  temporal mean already applied
                  wa_ref,      # (256, 512) audio_transform weight (in, out)
                  wi_ref,      # (512, 512) image_transform weight (in, out)
                  ba_ref,      # (1, 512)   audio_transform bias
                  bi_ref,      # (1, 512)   image_transform bias
                  dwa_ref,     # (1, 256)   wca[:,1] - wca[:,0]
                  dwv_ref,     # (1, 512)   wcv[:,1] - wcv[:,0]
                  db_ref,      # (1, 1) SMEM  bc[1] - bc[0]
                  out_ref):    # (TB, 512)
    audio = audio_ref[...]                          # (TB, 256)
    video = video_ref[...]                          # (TB, 512)

    # torch F.normalize: x / max(||x||_2, eps)  ==  x * rsqrt(max(sumsq, eps^2))
    eps2 = EPS * EPS
    inv_a = lax.rsqrt(jnp.maximum(jnp.sum(audio * audio, axis=1, keepdims=True), eps2))
    inv_v = lax.rsqrt(jnp.maximum(jnp.sum(video * video, axis=1, keepdims=True), eps2))
    a_n = audio * inv_a                             # (TB, 256)
    v_n = video * inv_v                             # (TB, 512)

    # 2-way softmax == sigmoid of the logit difference.  Logit diff computed as
    # lane reductions against pre-differenced attention weights (no MXU).
    d = (jnp.sum(a_n * dwa_ref[...], axis=1, keepdims=True)
         + jnp.sum(v_n * dwv_ref[...], axis=1, keepdims=True)
         + db_ref[0, 0])                            # (TB, 1)
    attn1 = jax.nn.sigmoid(d)                       # weight on video modality
    attn0 = 1.0 - attn1                             # weight on audio modality

    # Two dots (no lane-axis concat temp), matching the reference formulation.
    a_t = jnp.dot(a_n, wa_ref[...], preferred_element_type=jnp.float32) + ba_ref[...]
    v_t = jnp.dot(v_n, wi_ref[...], preferred_element_type=jnp.float32) + bi_ref[...]
    out_ref[...] = attn0 * a_t + attn1 * v_t


def _pick_batch_tile(batch):
    # Large, sublane-aligned tiles (HBM efficiency), but try to keep >=2 grid
    # steps so both v7x TensorCores get work under "parallel" semantics.
    if batch <= 8:
        return batch                       # block == full batch dim (no ragged edge)
    half = -(-batch // 2)                  # cdiv(batch, 2)
    return min(512, ((half + 7) // 8) * 8)


def fusion_pallas(audio_emb, face_emb, p):
    B = audio_emb.shape[0]

    # Hoist the temporal mean: kernel then streams only a (TB, 512) block per
    # step (no sublane-padded (TB, T, 512) tile, VMEM/HBM footprint / T).
    video_mean = jnp.mean(face_emb, axis=1)                          # (B, 512)

    # Trace-time parameter prep (algebraically exact reformulation).
    dwa = (p["wca"][:, 1] - p["wca"][:, 0]).reshape(1, AUDIO_DIM)    # (1, 256)
    dwv = (p["wcv"][:, 1] - p["wcv"][:, 0]).reshape(1, IMAGE_DIM)    # (1, 512)
    db = (p["bc"][:, 1] - p["bc"][:, 0]).reshape(1, 1)               # (1, 1)

    TB = _pick_batch_tile(B)
    grid = (pl.cdiv(B, TB),)   # ragged last block is fine: math is row-independent

    # VMEM budget derived from the actual block sizes (double-buffered streamed
    # blocks + weights, both possibly double-buffered) plus margin.  Stays far
    # below the v7x 64 MiB per-TC VMEM even at TB=512.
    stream_bytes = 2 * TB * (AUDIO_DIM + 2 * OUT_DIM) * 4            # in+out, 2 bufs
    weight_bytes = 2 * (AUDIO_DIM * OUT_DIM + OUT_DIM * OUT_DIM
                        + 4 * OUT_DIM + AUDIO_DIM + 8) * 4
    vmem_limit = stream_bytes + weight_bytes + (8 << 20)
    # TODO(synk): constant-index weight blocks could be pinned single-buffered
    # (pipeline_mode) to save ~1.5 MiB on v7x; negligible at this budget.

    return pl.pallas_call(
        fusion_kernel,
        out_shape=jax.ShapeDtypeStruct((B, OUT_DIM), jnp.float32),
        grid=grid,
        in_specs=[
            pl.BlockSpec((TB, AUDIO_DIM), lambda i: (i, 0)),
            pl.BlockSpec((TB, IMAGE_DIM), lambda i: (i, 0)),
            pl.BlockSpec((AUDIO_DIM, OUT_DIM), lambda i: (0, 0)),
            pl.BlockSpec((IMAGE_DIM, OUT_DIM), lambda i: (0, 0)),
            pl.BlockSpec((1, OUT_DIM), lambda i: (0, 0)),
            pl.BlockSpec((1, OUT_DIM), lambda i: (0, 0)),
            pl.BlockSpec((1, AUDIO_DIM), lambda i: (0, 0)),
            pl.BlockSpec((1, IMAGE_DIM), lambda i: (0, 0)),
            pl.BlockSpec((1, 1), lambda i: (0, 0),
                         memory_space=pltpu.MemorySpace.SMEM),
        ],
        out_specs=pl.BlockSpec((TB, OUT_DIM), lambda i: (i, 0)),
        compiler_params=pltpu.CompilerParams(
            dimension_semantics=("parallel",),
            vmem_limit_bytes=vmem_limit,
        ),
    )(audio_emb, video_mean, p["wa"], p["wi"], p["ba"], p["bi"], dwa, dwv, db)


# ----------------------------------------------------------------------------
# Plain-JAX glue: deterministic stand-ins for the pretrained backbones.
# ----------------------------------------------------------------------------
# TODO(synk): WavLM_Base_MHFA and InceptionResnetV1 are full pretrained networks
# (transformer / deep CNN); no clean single-kernel Pallas equivalent. Replaced
# by deterministic linear projection stubs producing the exact embedding shapes
# the fusion module expects.
def speaker_extractor_stub(audio_input, w_spk):
    # audio_input: (B, num_samples) raw waveform -> (B, 256)
    return audio_input @ w_spk


def vit_face_stub(video_input, w_face):
    # video_input: (B, T, 3, 112, 112)  (matches torch NCHW frame layout)
    B, T = video_input.shape[0], video_input.shape[1]
    frames = video_input.reshape(-1, 3, 112, 112)              # view(-1, 3, 112, 112)
    pooled = jnp.mean(frames, axis=(2, 3))                     # (B*T, 3)
    face_emb = pooled @ w_face                                 # (B*T, 512)
    return face_emb.reshape(B, T, IMAGE_DIM)                   # view(B, T, 512)


@jax.jit
def audio_visual_forward(audio_input, video_input, params):
    # jit the whole forward so the backbone-stub producers, the hoisted
    # temporal mean, and the fusion pallas_call live in one XLA program.
    audio_emb = speaker_extractor_stub(audio_input, params["w_spk"])
    face_emb = vit_face_stub(video_input, params["w_face"])
    return fusion_pallas(audio_emb, face_emb, params)


# Pure-JAX reference of the fusion (original formulation, for correctness).
def fusion_ref(audio_emb, face_emb, p):
    video = jnp.mean(face_emb, axis=1)

    def l2norm(x):
        n = jnp.sqrt(jnp.sum(x * x, axis=1, keepdims=True))
        return x / jnp.maximum(n, EPS)

    a_n, v_n = l2norm(audio_emb), l2norm(video)
    hi = jax.lax.Precision.HIGHEST
    logits = (jnp.dot(a_n, p["wca"], precision=hi)
              + jnp.dot(v_n, p["wcv"], precision=hi) + p["bc"])
    attn = jax.nn.softmax(logits, axis=1)
    a_t = jnp.dot(a_n, p["wa"], precision=hi) + p["ba"]
    v_t = jnp.dot(v_n, p["wi"], precision=hi) + p["bi"]
    return a_t * attn[:, 0:1] + v_t * attn[:, 1:2]


if __name__ == "__main__":
    key = jax.random.PRNGKey(0)
    ks = jax.random.split(key, 10)

    B, T, SAMPLES = 2, 4, 1600

    # Deterministic synthetic parameters (shapes from MeanSoftAttentionFusion.__init__)
    params = {
        "wa":  0.02 * jax.random.normal(ks[0], (AUDIO_DIM, OUT_DIM), jnp.float32),
        "ba":  0.01 * jax.random.normal(ks[1], (1, OUT_DIM), jnp.float32),
        "wi":  0.02 * jax.random.normal(ks[2], (IMAGE_DIM, OUT_DIM), jnp.float32),
        "bi":  0.01 * jax.random.normal(ks[3], (1, OUT_DIM), jnp.float32),
        "wca": 0.02 * jax.random.normal(ks[4], (AUDIO_DIM, 2), jnp.float32),
        "wcv": 0.02 * jax.random.normal(ks[5], (IMAGE_DIM, 2), jnp.float32),
        "bc":  0.01 * jax.random.normal(ks[6], (1, 2), jnp.float32),
        # backbone stubs
        "w_spk":  0.02 * jax.random.normal(ks[7], (SAMPLES, AUDIO_DIM), jnp.float32),
        "w_face": 0.02 * jax.random.normal(ks[8], (3, IMAGE_DIM), jnp.float32),
    }

    audio_input = jax.random.normal(ks[9], (B, SAMPLES), jnp.float32)
    video_input = jax.random.normal(key, (B, T, 3, 112, 112), jnp.float32)

    emb = audio_visual_forward(audio_input, video_input, params)
    emb = jax.block_until_ready(emb)
    assert emb.shape == (B, OUT_DIM)

    # Verify Pallas fusion against pure-JAX reference.
    audio_emb = speaker_extractor_stub(audio_input, params["w_spk"])
    face_emb = vit_face_stub(video_input, params["w_face"])
    ref = fusion_ref(audio_emb, face_emb, params)
    assert jnp.allclose(emb, ref, atol=2e-4, rtol=1e-3), "mismatch vs reference"

    print("KERNEL_OK")
</pallas_src>

<mosaic_0001>
module attributes {stable_mosaic.version = 11 : i64} {
  func.func @fusion_kernel(%arg0: i32, %arg1: memref<2x256xf32, #tpu.memory_space<vmem>>, %arg2: memref<2x512xf32, #tpu.memory_space<vmem>>, %arg3: memref<256x512xf32, #tpu.memory_space<vmem>>, %arg4: memref<512x512xf32, #tpu.memory_space<vmem>>, %arg5: memref<1x512xf32, #tpu.memory_space<vmem>>, %arg6: memref<1x512xf32, #tpu.memory_space<vmem>>, %arg7: memref<1x256xf32, #tpu.memory_space<vmem>>, %arg8: memref<1x512xf32, #tpu.memory_space<vmem>>, %arg9: memref<1x1xf32, #tpu.memory_space<smem>>, %arg10: memref<2x512xf32, #tpu.memory_space<vmem>>) attributes {dimension_semantics = [#tpu.dimension_semantics<parallel>], iteration_bounds = array<i64: 1>, scalar_prefetch = 0 : i64, scratch_operands = 0 : i64, tpu.core_type = #tpu.core_type<tc>, window_params = [{transform_indices = @transform_0, window_bounds = array<i64: 2, 256>}, {transform_indices = @transform_1, window_bounds = array<i64: 2, 512>}, {pipeline_mode = #tpu.pipeline_mode<synchronous>, transform_indices = @transform_2, window_bounds = array<i64: 256, 512>}, {pipeline_mode = #tpu.pipeline_mode<synchronous>, transform_indices = @transform_3, window_bounds = array<i64: 512, 512>}, {pipeline_mode = #tpu.pipeline_mode<synchronous>, transform_indices = @transform_4, window_bounds = array<i64: 1, 512>}, {pipeline_mode = #tpu.pipeline_mode<synchronous>, transform_indices = @transform_5, window_bounds = array<i64: 1, 512>}, {pipeline_mode = #tpu.pipeline_mode<synchronous>, transform_indices = @transform_6, window_bounds = array<i64: 1, 256>}, {pipeline_mode = #tpu.pipeline_mode<synchronous>, transform_indices = @transform_7, window_bounds = array<i64: 1, 512>}, {transform_indices = @transform_8, window_bounds = array<i64: 1, 1>}, {transform_indices = @transform_9, window_bounds = array<i64: 2, 512>}]} {
    %c0 = arith.constant 0 : index
    %c0_0 = arith.constant 0 : index
    %0 = vector.load %arg1[%c0, %c0_0] : memref<2x256xf32, #tpu.memory_space<vmem>>, vector<2x256xf32>
    %c0_1 = arith.constant 0 : index
    %c0_2 = arith.constant 0 : index
    %1 = vector.load %arg2[%c0_1, %c0_2] : memref<2x512xf32, #tpu.memory_space<vmem>>, vector<2x512xf32>
    %2 = arith.mulf %0, %0 : vector<2x256xf32>
    %cst = arith.constant dense<0.000000e+00> : vector<2xf32>
    %3 = vector.multi_reduction <add>, %2, %cst [1] : vector<2x256xf32> to vector<2xf32>
    %4 = vector.shape_cast %3 : vector<2xf32> to vector<2x1xf32>
    %cst_3 = arith.constant 1.000000e-24 : f32
    %5 = vector.broadcast %cst_3 : f32 to vector<2x1xf32>
    %6 = arith.maximumf %4, %5 : vector<2x1xf32>
    %7 = math.rsqrt %6 : vector<2x1xf32>
    %8 = arith.mulf %1, %1 : vector<2x512xf32>
    %cst_4 = arith.constant dense<0.000000e+00> : vector<2xf32>
    %9 = vector.multi_reduction <add>, %8, %cst_4 [1] : vector<2x512xf32> to vector<2xf32>
    %10 = vector.shape_cast %9 : vector<2xf32> to vector<2x1xf32>
    %cst_5 = arith.constant 1.000000e-24 : f32
    %11 = vector.broadcast %cst_5 : f32 to vector<2x1xf32>
    %12 = arith.maximumf %10, %11 : vector<2x1xf32>
    %13 = math.rsqrt %12 : vector<2x1xf32>
    %14 = vector.broadcast %7 : vector<2x1xf32> to vector<2x256xf32>
    %15 = arith.mulf %0, %14 : vector<2x256xf32>
    %16 = vector.broadcast %13 : vector<2x1xf32> to vector<2x512xf32>
    %17 = arith.mulf %1, %16 : vector<2x512xf32>
    %c0_6 = arith.constant 0 : index
    %c0_7 = arith.constant 0 : index
    %18 = vector.load %arg7[%c0_6, %c0_7] : memref<1x256xf32, #tpu.memory_space<vmem>>, vector<1x256xf32>
    %19 = vector.broadcast %18 : vector<1x256xf32> to vector<2x256xf32>
    %20 = arith.mulf %15, %19 : vector<2x256xf32>
    %cst_8 = arith.constant dense<0.000000e+00> : vector<2xf32>
    %21 = vector.multi_reduction <add>, %20, %cst_8 [1] : vector<2x256xf32> to vector<2xf32>
    %22 = vector.shape_cast %21 : vector<2xf32> to vector<2x1xf32>
    %c0_9 = arith.constant 0 : index
    %c0_10 = arith.constant 0 : index
    %23 = vector.load %arg8[%c0_9, %c0_10] : memref<1x512xf32, #tpu.memory_space<vmem>>, vector<1x512xf32>
    %24 = vector.broadcast %23 : vector<1x512xf32> to vector<2x512xf32>
    %25 = arith.mulf %17, %24 : vector<2x512xf32>
    %cst_11 = arith.constant dense<0.000000e+00> : vector<2xf32>
    %26 = vector.multi_reduction <add>, %25, %cst_11 [1] : vector<2x512xf32> to vector<2xf32>
    %27 = vector.shape_cast %26 : vector<2xf32> to vector<2x1xf32>
    %28 = arith.addf %22, %27 : vector<2x1xf32>
    %c0_12 = arith.constant 0 : index
    %c0_13 = arith.constant 0 : index
    %29 = memref.load %arg9[%c0_12, %c0_13] : memref<1x1xf32, #tpu.memory_space<smem>>
    %30 = vector.broadcast %29 : f32 to vector<2x1xf32>
    %31 = arith.addf %28, %30 : vector<2x1xf32>
    %32 = arith.negf %31 : vector<2x1xf32>
    %33 = math.exp %32 : vector<2x1xf32>
    %cst_14 = arith.constant 1.000000e+00 : f32
    %34 = vector.broadcast %cst_14 : f32 to vector<2x1xf32>
    %35 = arith.addf %34, %33 : vector<2x1xf32>
    %36 = arith.divf %34, %35 : vector<2x1xf32>
    %cst_15 = arith.constant 1.000000e+00 : f32
    %37 = vector.broadcast %cst_15 : f32 to vector<2x1xf32>
    %38 = arith.subf %37, %36 : vector<2x1xf32>
    %c0_16 = arith.constant 0 : index
    %c0_17 = arith.constant 0 : index
    %39 = vector.load %arg3[%c0_16, %c0_17] : memref<256x512xf32, #tpu.memory_space<vmem>>, vector<256x512xf32>
    %cst_18 = arith.constant dense<0.000000e+00> : vector<2x512xf32>
    %40 = tpu.matmul %15, %39, %cst_18 {dimension_numbers = #tpu.dot_dimension_numbers<[1], [0], [0], [1], [0, 0, 1, 1], [], []>} : vector<2x256xf32>, vector<256x512xf32>, vector<2x512xf32> -> vector<2x512xf32>
    %c0_19 = arith.constant 0 : index
    %c0_20 = arith.constant 0 : index
    %41 = vector.load %arg5[%c0_19, %c0_20] : memref<1x512xf32, #tpu.memory_space<vmem>>, vector<1x512xf32>
    %42 = vector.broadcast %41 : vector<1x512xf32> to vector<2x512xf32>
    %43 = arith.addf %40, %42 : vector<2x512xf32>
    %c0_21 = arith.constant 0 : index
    %c0_22 = arith.constant 0 : index
    %44 = vector.load %arg4[%c0_21, %c0_22] : memref<512x512xf32, #tpu.memory_space<vmem>>, vector<512x512xf32>
    %cst_23 = arith.constant dense<0.000000e+00> : vector<2x512xf32>
    %45 = tpu.matmul %17, %44, %cst_23 {dimension_numbers = #tpu.dot_dimension_numbers<[1], [0], [0], [1], [0, 0, 1, 1], [], []>} : vector<2x512xf32>, vector<512x512xf32>, vector<2x512xf32> -> vector<2x512xf32>
    %c0_24 = arith.constant 0 : index
    %c0_25 = arith.constant 0 : index
    %46 = vector.load %arg6[%c0_24, %c0_25] : memref<1x512xf32, #tpu.memory_space<vmem>>, vector<1x512xf32>
    %47 = vector.broadcast %46 : vector<1x512xf32> to vector<2x512xf32>
    %48 = arith.addf %45, %47 : vector<2x512xf32>
    %49 = vector.broadcast %38 : vector<2x1xf32> to vector<2x512xf32>
    %50 = arith.mulf %49, %43 : vector<2x512xf32>
    %51 = vector.broadcast %36 : vector<2x1xf32> to vector<2x512xf32>
    %52 = arith.mulf %51, %48 : vector<2x512xf32>
    %53 = arith.addf %50, %52 : vector<2x512xf32>
    %c0_26 = arith.constant 0 : index
    %c0_27 = arith.constant 0 : index
    %54 = vector.load %arg10[%c0_26, %c0_27] : memref<2x512xf32, #tpu.memory_space<vmem>>, vector<2x512xf32>
    tpu.vector_store %arg10[%c0_26, %c0_27], %53 {strides = array<i32>} : memref<2x512xf32, #tpu.memory_space<vmem>>, vector<2x512xf32>,
    return
  }
  func.func @transform_0(%arg0: i32) -> (i32, i32) {
    %c0_i32 = arith.constant 0 : i32
    %c0_i32_0 = arith.constant 0 : i32
    return %arg0, %c0_i32 : i32, i32
  }
  func.func @transform_1(%arg0: i32) -> (i32, i32) {
    %c0_i32 = arith.constant 0 : i32
    %c0_i32_0 = arith.constant 0 : i32
    return %arg0, %c0_i32 : i32, i32
  }
  func.func @transform_2(%arg0: i32) -> (i32, i32) {
    %c0_i32 = arith.constant 0 : i32
    %c0_i32_0 = arith.constant 0 : i32
    %c0_i32_1 = arith.constant 0 : i32
    return %c0_i32, %c0_i32_0 : i32, i32
  }
  func.func @transform_3(%arg0: i32) -> (i32, i32) {
    %c0_i32 = arith.constant 0 : i32
    %c0_i32_0 = arith.constant 0 : i32
    %c0_i32_1 = arith.constant 0 : i32
    return %c0_i32, %c0_i32_0 : i32, i32
  }
  func.func @transform_4(%arg0: i32) -> (i32, i32) {
    %c0_i32 = arith.constant 0 : i32
    %c0_i32_0 = arith.constant 0 : i32
    %c0_i32_1 = arith.constant 0 : i32
    return %c0_i32, %c0_i32_0 : i32, i32
  }
  func.func @transform_5(%arg0: i32) -> (i32, i32) {
    %c0_i32 = arith.constant 0 : i32
    %c0_i32_0 = arith.constant 0 : i32
    %c0_i32_1 = arith.constant 0 : i32
    return %c0_i32, %c0_i32_0 : i32, i32
  }
  func.func @transform_6(%arg0: i32) -> (i32, i32) {
    %c0_i32 = arith.constant 0 : i32
    %c0_i32_0 = arith.constant 0 : i32
    %c0_i32_1 = arith.constant 0 : i32
    return %c0_i32, %c0_i32_0 : i32, i32
  }
  func.func @transform_7(%arg0: i32) -> (i32, i32) {
    %c0_i32 = arith.constant 0 : i32
    %c0_i32_0 = arith.constant 0 : i32
    %c0_i32_1 = arith.constant 0 : i32
    return %c0_i32, %c0_i32_0 : i32, i32
  }
  func.func @transform_8(%arg0: i32) -> (i32, i32) {
    %c0_i32 = arith.constant 0 : i32
    %c0_i32_0 = arith.constant 0 : i32
    %c0_i32_1 = arith.constant 0 : i32
    return %c0_i32, %c0_i32_0 : i32, i32
  }
  func.func @transform_9(%arg0: i32) -> (i32, i32) {
    %c0_i32 = arith.constant 0 : i32
    %c0_i32_0 = arith.constant 0 : i32
    return %arg0, %c0_i32 : i32, i32
  }
}

</mosaic_0001>

<llo_original>
// kernel: audio_visual_forward.1
$region0: #{audio_visual_forward.1}
  #allocation0 [shape = 'u32[]', space=smem, size = 0x4, offset = 0x4, fixed_abs, tag = 'smem constant byte address 0x4 - core index']
  #allocation1 [shape = 'u32[144,128]{1,0:T(1,128)}', space=vmem, size = 0x12000, scoped, tag = 'internal scratch']
  #allocation2 [shape = 'f32[1,1]{1,0:T(1,128)S(6)}', space=smem, size = 0x200, scoped, tag = 'scoped memory for audio_visual_forward.1']
  %s0 = inlined_call_operand.vmem [shape: f32[2,256], index: 0, kind: input, shape index: {}]
  %s1 = inlined_call_operand.vmem [shape: f32[2,512], index: 1, kind: input, shape index: {}]
  %s2 = inlined_call_operand.vmem [shape: f32[256,512], index: 2, kind: input, shape index: {}]
  %s3 = inlined_call_operand.vmem [shape: f32[512,512], index: 3, kind: input, shape index: {}]
  %s4 = inlined_call_operand.vmem [shape: f32[1,512], index: 4, kind: input, shape index: {}]
  %s5 = inlined_call_operand.vmem [shape: f32[1,512], index: 5, kind: input, shape index: {}]
  %s6 = inlined_call_operand.vmem [shape: f32[1,256], index: 6, kind: input, shape index: {}]
  %s7 = inlined_call_operand.vmem [shape: f32[1,512], index: 7, kind: input, shape index: {}]
  %s8 = inlined_call_operand.<no memory space> [shape: f32[1,1], index: 8, kind: input, shape index: {}]
  %s9 = inlined_call_operand.hbm [shape: f32[2,512], index: 9, kind: output, shape index: {}]
  %s10 = sld [smem:[#allocation0]]
  $region46: #{audio_visual_forward.1} parent=0
    _
  %s12 = ssub.s32 1, %s10
  %s13 = scalar_select 0, %s12, %s10
  %14 = sst [smem:[#allocation2]] %s8
  $region1: #{audio_visual_forward.1} parent=0
    #allocation3 [shape = 'u8[4096]{0}', space=vmem, size = 0x1000, scoped, tag = 'output window, operand 0, single buffered']
    #allocation4 [shape = 's32[1]{0}', space=sflag, size = 0x4, scoped, tag = 'scoped memory for audio_visual_forward.1']
    %15 = vsyncpa [#allocation4], 0
    // Predicated region
    $region2: #{audio_visual_forward.1} parent=1 // pred_check
      _
    $region3: #{audio_visual_forward.1} parent=1 // pred_check_branch
      %17 = sbr.rel (0) target = $region5
    $region4: #{audio_visual_forward.1} parent=1 // pred_region
      _
    $region5: #{audio_visual_forward.1} parent=1 // pred_fallthru
      _
    // Predicated region
    $region6: #{audio_visual_forward.1} parent=1 // pred_check
      _
    $region7: #{audio_visual_forward.1} parent=1 // pred_check_branch
      %19 = sbr.rel (0) target = $region9
    $region8: #{audio_visual_forward.1} parent=1 // pred_region
      _
    $region9: #{audio_visual_forward.1} parent=1 // pred_fallthru
      _
    // Predicated region
    $region10: #{audio_visual_forward.1} parent=1 // pred_check
      _
    $region11: #{audio_visual_forward.1} parent=1 // pred_check_branch
      %21 = sbr.rel (0) target = $region13
    $region12: #{audio_visual_forward.1} parent=1 // pred_region
      _
    $region13: #{audio_visual_forward.1} parent=1 // pred_fallthru
      _
    // Predicated region
    $region14: #{audio_visual_forward.1} parent=1 // pred_check
      _
    $region15: #{audio_visual_forward.1} parent=1 // pred_check_branch
      %23 = sbr.rel (0) target = $region17
    $region16: #{audio_visual_forward.1} parent=1 // pred_region
      _
    $region17: #{audio_visual_forward.1} parent=1 // pred_fallthru
      _
    // Predicated region
    $region18: #{audio_visual_forward.1} parent=1 // pred_check
      _
    $region19: #{audio_visual_forward.1} parent=1 // pred_check_branch
      %25 = sbr.rel (0) target = $region21
    $region20: #{audio_visual_forward.1} parent=1 // pred_region
      _
    $region21: #{audio_visual_forward.1} parent=1 // pred_fallthru
      _
    // Predicated region
    $region22: #{audio_visual_forward.1} parent=1 // pred_check
      _
    $region23: #{audio_visual_forward.1} parent=1 // pred_check_branch
      %27 = sbr.rel (0) target = $region25
    $region24: #{audio_visual_forward.1} parent=1 // pred_region
      _
    $region25: #{audio_visual_forward.1} parent=1 // pred_fallthru
      _
    // Predicated region
    $region26: #{audio_visual_forward.1} parent=1 // pred_check
      _
    $region27: #{audio_visual_forward.1} parent=1 // pred_check_branch
      %29 = sbr.rel (0) target = $region29
    $region28: #{audio_visual_forward.1} parent=1 // pred_region
      _
    $region29: #{audio_visual_forward.1} parent=1 // pred_fallthru
      _
    // Predicated region
    $region30: #{audio_visual_forward.1} parent=1 // pred_check
      _
    $region31: #{audio_visual_forward.1} parent=1 // pred_check_branch
      %31 = sbr.rel (0) target = $region33
    $region32: #{audio_visual_forward.1} parent=1 // pred_region
      _
    $region33: #{audio_visual_forward.1} parent=1 // pred_fallthru
      _
    // Predicated region
    $region34: #{audio_visual_forward.1} parent=1 // pred_check
      _
    $region35: #{audio_visual_forward.1} parent=1 // pred_check_branch
      %33 = sbr.rel (0) target = $region37
    $region36: #{audio_visual_forward.1} parent=1 // pred_region
      _
    $region37: #{audio_visual_forward.1} parent=1 // pred_fallthru
      _
    %v34 = vld [vmem:[%s0] sm:$0xf]
    %v35 = vld [vmem:[%s1] sm:$0xff]
    %v36 = vmul.f32 %v34, %v34
    %v39 = vunpack.c.l.s4 1983009808
    %v40 = vunpack.c.0.s8 %v39
    %v41 = vlaneseq
    %v42 = vshrl.u32 %v41, 7
    %v43 = vsub.s32 %v40, %v42
    %v44 = vrot.slane %v36, %v43
    %v45 = vcombine.high %v44, %v44
    %vm48 = vcmask 1041408
    %v49 = vsel %vm48, %v44, 0.0
    %v50 = vsel %vm48, %v45, 0.0
    %v51 = vadd.f32 %v49, %v50
    %52 = vadd.xlane.f32.xlu0 %v51
    %v53 = vpop.xlane.xlu0 %52
    %v54 = vmax.f32 %v53, 1e-24
    %v55 = vrsqrt.pop %v54
    %v56 = vmul.f32 %v35, %v35
    %v58 = vcombine.high %v56, %v56
    %v60 = vunpack.c.l.s4 1983009808
    %v61 = vunpack.c.0.s8 %v60
    %v62 = vlaneseq
    %v63 = vshrl.u32 %v62, 7
    %v64 = vsub.s32 %v61, %v63
    %v65 = vrot.slane %v56, %v64
    %v67 = vunpack.c.l.s4 1983009808
    %v68 = vunpack.c.0.s8 %v67
    %v69 = vlaneseq
    %v70 = vshrl.u32 %v69, 7
    %v71 = vsub.s32 %v68, %v70
    %v72 = vrot.slane %v58, %v71
    %v73 = vcombine.high %v65, %v65
    %v74 = vcombine.high %v72, %v72
    %v79 = vsel %vm48, %v65, 0.0
    %v80 = vsel %vm48, %v73, 0.0
    %v81 = vadd.f32 %v79, %v80
    %v82 = vsel %vm48, %v72, 0.0
    %v83 = vadd.f32 %v81, %v82
    %v84 = vsel %vm48, %v74, 0.0
    %v85 = vadd.f32 %v83, %v84
    %86 = vadd.xlane.f32.xlu0 %v85
    %v87 = vpop.xlane.xlu0 %86
    %v88 = vmax.f32 %v87, 1e-24
    %v89 = vrsqrt.pop %v88
    %v92 = vunpack.c.l.s4 269488144
    %v93 = vunpack.c.0.s8 %v92
    %v94 = vlaneseq
    %v95 = vshrl.u32 %v94, 7
    %v96 = vsub.s32 %v93, %v95
    %v97 = vrot.slane %v55, %v96
    %v99 = vmul.f32 %v34, %v97
    %v102 = vunpack.c.l.s4 269488144
    %v103 = vunpack.c.0.s8 %v102
    %v104 = vlaneseq
    %v105 = vshrl.u32 %v104, 7
    %v106 = vsub.s32 %v103, %v105
    %v107 = vrot.slane %v89, %v106
    %v109 = vmul.f32 %v35, %v107
    %v110 = vld [vmem:[%s6] sm:$0x3]
    %v112 = vlaneseq
    %v113 = vshrl.u32 %v112, 7
    %v114 = vsub.s32 0, %v113
    %v115 = vrot.slane %v110, %v114
    %v116 = vlaneseq
    %v117 = vshrl.u32 %v116, 7
    %v118 = vsub.s32 1, %v117
    %v119 = vrot.slane %v110, %v118
    %v120 = vcombine.low %v115, %v119
    %v122 = vunpack.c.l.s4 1983009808
    %v123 = vunpack.c.0.s8 %v122
    %v124 = vlaneseq
    %v125 = vshrl.u32 %v124, 7
    %v126 = vsub.s32 %v123, %v125
    %v127 = vrot.slane %v120, %v126
    %v129 = vmul.f32 %v99, %v127
    %v132 = vunpack.c.l.s4 1983009808
    %v133 = vunpack.c.0.s8 %v132
    %v134 = vlaneseq
    %v135 = vshrl.u32 %v134, 7
    %v136 = vsub.s32 %v133, %v135
    %v137 = vrot.slane %v129, %v136
    %v138 = vcombine.high %v137, %v137
    %v141 = vsel %vm48, %v137, 0.0
    %v142 = vsel %vm48, %v138, 0.0
    %v143 = vadd.f32 %v141, %v142
    %144 = vadd.xlane.f32.xlu0 %v143
    %v145 = vpop.xlane.xlu0 %144
    %v146 = vld [vmem:[%s7] sm:$0xf]
    %v148 = vlaneseq
    %v149 = vshrl.u32 %v148, 7
    %v150 = vsub.s32 0, %v149
    %v151 = vrot.slane %v146, %v150
    %v152 = vlaneseq
    %v153 = vshrl.u32 %v152, 7
    %v154 = vsub.s32 1, %v153
    %v155 = vrot.slane %v146, %v154
    %v156 = vlaneseq
    %v157 = vshrl.u32 %v156, 7
    %v158 = vsub.s32 2, %v157
    %v159 = vrot.slane %v146, %v158
    %v160 = vlaneseq
    %v161 = vshrl.u32 %v160, 7
    %v162 = vsub.s32 3, %v161
    %v163 = vrot.slane %v146, %v162
    %v164 = vcombine.low %v151, %v155
    %v165 = vcombine.low %v159, %v163
    %v167 = vunpack.c.l.s4 1983009808
    %v168 = vunpack.c.0.s8 %v167
    %v169 = vlaneseq
    %v170 = vshrl.u32 %v169, 7
    %v171 = vsub.s32 %v168, %v170
    %v172 = vrot.slane %v164, %v171
    %v174 = vunpack.c.l.s4 1983009808
    %v175 = vunpack.c.0.s8 %v174
    %v176 = vlaneseq
    %v177 = vshrl.u32 %v176, 7
    %v178 = vsub.s32 %v175, %v177
    %v179 = vrot.slane %v165, %v178
    %v180 = vcombine.low %v172, %v179
    %v182 = vmul.f32 %v109, %v180
    %v184 = vcombine.high %v182, %v182
    %v186 = vunpack.c.l.s4 1983009808
    %v187 = vunpack.c.0.s8 %v186
    %v188 = vlaneseq
    %v189 = vshrl.u32 %v188, 7
    %v190 = vsub.s32 %v187, %v189
    %v191 = vrot.slane %v182, %v190
    %v193 = vunpack.c.l.s4 1983009808
    %v194 = vunpack.c.0.s8 %v193
    %v195 = vlaneseq
    %v196 = vshrl.u32 %v195, 7
    %v197 = vsub.s32 %v194, %v196
    %v198 = vrot.slane %v184, %v197
    %v199 = vcombine.high %v191, %v191
    %v200 = vcombine.high %v198, %v198
    %v205 = vsel %vm48, %v191, 0.0
    %v206 = vsel %vm48, %v199, 0.0
    %v207 = vadd.f32 %v205, %v206
    %v208 = vsel %vm48, %v198, 0.0
    %v209 = vadd.f32 %v207, %v208
    %v210 = vsel %vm48, %v200, 0.0
    %v211 = vadd.f32 %v209, %v210
    %212 = vadd.xlane.f32.xlu0 %v211
    %v213 = vpop.xlane.xlu0 %212
    %v214 = vadd.f32 %v145, %v213
    %s215 = sld [smem:[#allocation2]]
    %v216 = vstv %s215
    %v217 = vadd.f32 %v214, %v216
    %v218 = vxor.u32 %v217, 2147483648
    %v219 = vmul.f32 %v218, 1.442695
    %v220 = vpow.pop %v219
    %v221 = vadd.f32 %v220, 1.0
    %v222 = vrcp.pop %v221
    %v223 = vmul.f32 1.0, %v222
    %v224 = vsub.f32 1.0, %v223
    %v225 = vld [vmem:[%s2] sm:$0xff]
    %v226 = vld [vmem:[%s2 + $0x8] sm:$0xff]
    %v227 = vld [vmem:[%s2 + $0x10] sm:$0xff]
    %v228 = vld [vmem:[%s2 + $0x18] sm:$0xff]
    %v229 = vld [vmem:[%s2 + $0x20] sm:$0xff]
    %v230 = vld [vmem:[%s2 + $0x28] sm:$0xff]
    %v231 = vld [vmem:[%s2 + $0x30] sm:$0xff]
    %v232 = vld [vmem:[%s2 + $0x38] sm:$0xff]
    %v233 = vld [vmem:[%s2 + $0x40] sm:$0xff]
    %v234 = vld [vmem:[%s2 + $0x48] sm:$0xff]
    %v235 = vld [vmem:[%s2 + $0x50] sm:$0xff]
    %v236 = vld [vmem:[%s2 + $0x58] sm:$0xff]
    %v237 = vld [vmem:[%s2 + $0x60] sm:$0xff]
    %v238 = vld [vmem:[%s2 + $0x68] sm:$0xff]
    %v239 = vld [vmem:[%s2 + $0x70] sm:$0xff]
    %v240 = vld [vmem:[%s2 + $0x78] sm:$0xff]
    %v241 = vld [vmem:[%s2 + $0x80] sm:$0xff]
    %v242 = vld [vmem:[%s2 + $0x88] sm:$0xff]
    %v243 = vld [vmem:[%s2 + $0x90] sm:$0xff]
    %v244 = vld [vmem:[%s2 + $0x98] sm:$0xff]
    %v245 = vld [vmem:[%s2 + $0xa0] sm:$0xff]
    %v246 = vld [vmem:[%s2 + $0xa8] sm:$0xff]
    %v247 = vld [vmem:[%s2 + $0xb0] sm:$0xff]
    %v248 = vld [vmem:[%s2 + $0xb8] sm:$0xff]
    %v249 = vld [vmem:[%s2 + $0xc0] sm:$0xff]
    %v250 = vld [vmem:[%s2 + $0xc8] sm:$0xff]
    %v251 = vld [vmem:[%s2 + $0xd0] sm:$0xff]
    %v252 = vld [vmem:[%s2 + $0xd8] sm:$0xff]
    %v253 = vld [vmem:[%s2 + $0xe0] sm:$0xff]
    %v254 = vld [vmem:[%s2 + $0xe8] sm:$0xff]
    %v255 = vld [vmem:[%s2 + $0xf0] sm:$0xff]
    %v256 = vld [vmem:[%s2 + $0xf8] sm:$0xff]
    %v257 = vld [vmem:[%s2 + $0x100] sm:$0xff]
    %v258 = vld [vmem:[%s2 + $0x108] sm:$0xff]
    %v259 = vld [vmem:[%s2 + $0x110] sm:$0xff]
    %v260 = vld [vmem:[%s2 + $0x118] sm:$0xff]
    %v261 = vld [vmem:[%s2 + $0x120] sm:$0xff]
    %v262 = vld [vmem:[%s2 + $0x128] sm:$0xff]
    %v263 = vld [vmem:[%s2 + $0x130] sm:$0xff]
    %v264 = vld [vmem:[%s2 + $0x138] sm:$0xff]
    %v265 = vld [vmem:[%s2 + $0x140] sm:$0xff]
    %v266 = vld [vmem:[%s2 + $0x148] sm:$0xff]
    %v267 = vld [vmem:[%s2 + $0x150] sm:$0xff]
    %v268 = vld [vmem:[%s2 + $0x158] sm:$0xff]
    %v269 = vld [vmem:[%s2 + $0x160] sm:$0xff]
    %v270 = vld [vmem:[%s2 + $0x168] sm:$0xff]
    %v271 = vld [vmem:[%s2 + $0x170] sm:$0xff]
    %v272 = vld [vmem:[%s2 + $0x178] sm:$0xff]
    %v273 = vld [vmem:[%s2 + $0x180] sm:$0xff]
    %v274 = vld [vmem:[%s2 + $0x188] sm:$0xff]
    %v275 = vld [vmem:[%s2 + $0x190] sm:$0xff]
    %v276 = vld [vmem:[%s2 + $0x198] sm:$0xff]
    %v277 = vld [vmem:[%s2 + $0x1a0] sm:$0xff]
    %v278 = vld [vmem:[%s2 + $0x1a8] sm:$0xff]
    %v279 = vld [vmem:[%s2 + $0x1b0] sm:$0xff]
    %v280 = vld [vmem:[%s2 + $0x1b8] sm:$0xff]
    %v281 = vld [vmem:[%s2 + $0x1c0] sm:$0xff]
    %v282 = vld [vmem:[%s2 + $0x1c8] sm:$0xff]
    %v283 = vld [vmem:[%s2 + $0x1d0] sm:$0xff]
    %v284 = vld [vmem:[%s2 + $0x1d8] sm:$0xff]
    %v285 = vld [vmem:[%s2 + $0x1e0] sm:$0xff]
    %v286 = vld [vmem:[%s2 + $0x1e8] sm:$0xff]
    %v287 = vld [vmem:[%s2 + $0x1f0] sm:$0xff]
    %v288 = vld [vmem:[%s2 + $0x1f8] sm:$0xff]
    %v289 = vld [vmem:[%s2 + $0x200] sm:$0xff]
    %v290 = vld [vmem:[%s2 + $0x208] sm:$0xff]
    %v291 = vld [vmem:[%s2 + $0x210] sm:$0xff]
    %v292 = vld [vmem:[%s2 + $0x218] sm:$0xff]
    %v293 = vld [vmem:[%s2 + $0x220] sm:$0xff]
    %v294 = vld [vmem:[%s2 + $0x228] sm:$0xff]
    %v295 = vld [vmem:[%s2 + $0x230] sm:$0xff]
    %v296 = vld [vmem:[%s2 + $0x238] sm:$0xff]
    %v297 = vld [vmem:[%s2 + $0x240] sm:$0xff]
    %v298 = vld [vmem:[%s2 + $0x248] sm:$0xff]
    %v299 = vld [vmem:[%s2 + $0x250] sm:$0xff]
    %v300 = vld [vmem:[%s2 + $0x258] sm:$0xff]
    %v301 = vld [vmem:[%s2 + $0x260] sm:$0xff]
    %v302 = vld [vmem:[%s2 + $0x268] sm:$0xff]
    %v303 = vld [vmem:[%s2 + $0x270] sm:$0xff]
    %v304 = vld [vmem:[%s2 + $0x278] sm:$0xff]
    %v305 = vld [vmem:[%s2 + $0x280] sm:$0xff]
    %v306 = vld [vmem:[%s2 + $0x288] sm:$0xff]
    %v307 = vld [vmem:[%s2 + $0x290] sm:$0xff]
    %v308 = vld [vmem:[%s2 + $0x298] sm:$0xff]
    %v309 = vld [vmem:[%s2 + $0x2a0] sm:$0xff]
    %v310 = vld [vmem:[%s2 + $0x2a8] sm:$0xff]
    %v311 = vld [vmem:[%s2 + $0x2b0] sm:$0xff]
    %v312 = vld [vmem:[%s2 + $0x2b8] sm:$0xff]
    %v313 = vld [vmem:[%s2 + $0x2c0] sm:$0xff]
    %v314 = vld [vmem:[%s2 + $0x2c8] sm:$0xff]
    %v315 = vld [vmem:[%s2 + $0x2d0] sm:$0xff]
    %v316 = vld [vmem:[%s2 + $0x2d8] sm:$0xff]
    %v317 = vld [vmem:[%s2 + $0x2e0] sm:$0xff]
    %v318 = vld [vmem:[%s2 + $0x2e8] sm:$0xff]
    %v319 = vld [vmem:[%s2 + $0x2f0] sm:$0xff]
    %v320 = vld [vmem:[%s2 + $0x2f8] sm:$0xff]
    %v321 = vld [vmem:[%s2 + $0x300] sm:$0xff]
    %v322 = vld [vmem:[%s2 + $0x308] sm:$0xff]
    %v323 = vld [vmem:[%s2 + $0x310] sm:$0xff]
    %v324 = vld [vmem:[%s2 + $0x318] sm:$0xff]
    %v325 = vld [vmem:[%s2 + $0x320] sm:$0xff]
    %v326 = vld [vmem:[%s2 + $0x328] sm:$0xff]
    %v327 = vld [vmem:[%s2 + $0x330] sm:$0xff]
    %v328 = vld [vmem:[%s2 + $0x338] sm:$0xff]
    %v329 = vld [vmem:[%s2 + $0x340] sm:$0xff]
    %v330 = vld [vmem:[%s2 + $0x348] sm:$0xff]
    %v331 = vld [vmem:[%s2 + $0x350] sm:$0xff]
    %v332 = vld [vmem:[%s2 + $0x358] sm:$0xff]
    %v333 = vld [vmem:[%s2 + $0x360] sm:$0xff]
    %v334 = vld [vmem:[%s2 + $0x368] sm:$0xff]
    %v335 = vld [vmem:[%s2 + $0x370] sm:$0xff]
    %v336 = vld [vmem:[%s2 + $0x378] sm:$0xff]
    %v337 = vld [vmem:[%s2 + $0x380] sm:$0xff]
    %v338 = vld [vmem:[%s2 + $0x388] sm:$0xff]
    %v339 = vld [vmem:[%s2 + $0x390] sm:$0xff]
    %v340 = vld [vmem:[%s2 + $0x398] sm:$0xff]
    %v341 = vld [vmem:[%s2 + $0x3a0] sm:$0xff]
    %v342 = vld [vmem:[%s2 + $0x3a8] sm:$0xff]
    %v343 = vld [vmem:[%s2 + $0x3b0] sm:$0xff]
    %v344 = vld [vmem:[%s2 + $0x3b8] sm:$0xff]
    %v345 = vld [vmem:[%s2 + $0x3c0] sm:$0xff]
    %v346 = vld [vmem:[%s2 + $0x3c8] sm:$0xff]
    %v347 = vld [vmem:[%s2 + $0x3d0] sm:$0xff]
    %v348 = vld [vmem:[%s2 + $0x3d8] sm:$0xff]
    %v349 = vld [vmem:[%s2 + $0x3e0] sm:$0xff]
    %v350 = vld [vmem:[%s2 + $0x3e8] sm:$0xff]
    %v351 = vld [vmem:[%s2 + $0x3f0] sm:$0xff]
    %v352 = vld [vmem:[%s2 + $0x3f8] sm:$0xff]
    %v353 = vld [vmem:[%s4] sm:$0xf]
    %v355 = vlaneseq
    %v356 = vshrl.u32 %v355, 7
    %v357 = vsub.s32 0, %v356
    %v358 = vrot.slane %v353, %v357
    %v359 = vlaneseq
    %v360 = vshrl.u32 %v359, 7
    %v361 = vsub.s32 1, %v360
    %v362 = vrot.slane %v353, %v361
    %v363 = vlaneseq
    %v364 = vshrl.u32 %v363, 7
    %v365 = vsub.s32 2, %v364
    %v366 = vrot.slane %v353, %v365
    %v367 = vlaneseq
    %v368 = vshrl.u32 %v367, 7
    %v369 = vsub.s32 3, %v368
    %v370 = vrot.slane %v353, %v369
    %v377 = vunpack.c.l.s4 1983009808
    %v378 = vunpack.c.0.s8 %v377
    %v379 = vlaneseq
    %v380 = vshrl.u32 %v379, 7
    %v381 = vsub.s32 %v378, %v380
    %v382 = vrot.slane %v99, %v381
    %v383 = vcombine.high %v382, %v382
    %386 = vmatprep.subr.mxu0 %v226
    %387 = vmatpush1.msra.mxu0 %v225
    %388 = vmatprep.subr.mxu0 %v230
    %389 = vmatpush1.msra.mxu0 %v229
    %390 = vmatprep.subr.mxu0 %v234
    %391 = vmatpush1.msra.mxu0 %v233
    %392 = vmatprep.subr.mxu0 %v238
    %393 = vmatpush1.msra.mxu0 %v237
    %394 = vmatprep.subr.mxu0 %v242
    %395 = vmatpush1.msra.mxu0 %v241
    %396 = vmatprep.subr.mxu0 %v246
    %397 = vmatpush1.msra.mxu0 %v245
    %398 = vmatprep.subr.mxu0 %v250
    %399 = vmatpush1.msra.mxu0 %v249
    %400 = vmatprep.subr.mxu0 %v254
    %401 = vmatpush1.msra.mxu0 %v253
    %402 = vmatprep.subr.mxu0 %v258
    %403 = vmatpush1.msra.mxu0 %v257
    %404 = vmatprep.subr.mxu0 %v262
    %405 = vmatpush1.msra.mxu0 %v261
    %406 = vmatprep.subr.mxu0 %v266
    %407 = vmatpush1.msra.mxu0 %v265
    %408 = vmatprep.subr.mxu0 %v270
    %409 = vmatpush1.msra.mxu0 %v269
    %410 = vmatprep.subr.mxu0 %v274
    %411 = vmatpush1.msra.mxu0 %v273
    %412 = vmatprep.subr.mxu0 %v278
    %413 = vmatpush1.msra.mxu0 %v277
    %414 = vmatprep.subr.mxu0 %v282
    %415 = vmatpush1.msra.mxu0 %v281
    %416 = vmatprep.subr.mxu0 %v286
    %417 = vmatpush1.msra.mxu0 %v285
    %418 = vmatprep.subr.mxu0 %v290
    %419 = vmatpush1.msra.mxu0 %v289
    %420 = vmatprep.subr.mxu0 %v294
    %421 = vmatpush1.msra.mxu0 %v293
    %422 = vmatprep.subr.mxu0 %v298
    %423 = vmatpush1.msra.mxu0 %v297
    %424 = vmatprep.subr.mxu0 %v302
    %425 = vmatpush1.msra.mxu0 %v301
    %426 = vmatprep.subr.mxu0 %v306
    %427 = vmatpush1.msra.mxu0 %v305
    %428 = vmatprep.subr.mxu0 %v310
    %429 = vmatpush1.msra.mxu0 %v309
    %430 = vmatprep.subr.mxu0 %v314
    %431 = vmatpush1.msra.mxu0 %v313
    %432 = vmatprep.subr.mxu0 %v318
    %433 = vmatpush1.msra.mxu0 %v317
    %434 = vmatprep.subr.mxu0 %v322
    %435 = vmatpush1.msra.mxu0 %v321
    %436 = vmatprep.subr.mxu0 %v326
    %437 = vmatpush1.msra.mxu0 %v325
    %438 = vmatprep.subr.mxu0 %v330
    %439 = vmatpush1.msra.mxu0 %v329
    %440 = vmatprep.subr.mxu0 %v334
    %441 = vmatpush1.msra.mxu0 %v333
    %442 = vmatprep.subr.mxu0 %v338
    %443 = vmatpush1.msra.mxu0 %v337
    %444 = vmatprep.subr.mxu0 %v342
    %445 = vmatpush1.msra.mxu0 %v341
    %446 = vmatprep.subr.mxu0 %v346
    %447 = vmatpush1.msra.mxu0 %v345
    %448 = vmatprep.subr.mxu0 %v350
    %449 = vmatpush1.msra.mxu0 %v349
    %450 = vmatprep.mubr.f32.mxu0 %v383
    %451 = vmatmul.mubr.f32.gmra.mrb[0].mxu0 %v382
    %v452 = vpop.f32.mrb[0].mxu0
    %v453 = vadd.f32 %v358, %v452
    %v454 = vpop.f32.mrb[0].mxu0
    %v455 = vadd.f32 %v362, %v454
    %456 = vdwg.mxu0
    %457 = vmatprep.subr.mxu0 %v228
    %458 = vmatpush1.msra.mxu0 %v227
    %459 = vmatprep.subr.mxu0 %v232
    %460 = vmatpush1.msra.mxu0 %v231
    %461 = vmatprep.subr.mxu0 %v236
    %462 = vmatpush1.msra.mxu0 %v235
    %463 = vmatprep.subr.mxu0 %v240
    %464 = vmatpush1.msra.mxu0 %v239
    %465 = vmatprep.subr.mxu0 %v244
    %466 = vmatpush1.msra.mxu0 %v243
    %467 = vmatprep.subr.mxu0 %v248
    %468 = vmatpush1.msra.mxu0 %v247
    %469 = vmatprep.subr.mxu0 %v252
    %470 = vmatpush1.msra.mxu0 %v251
    %471 = vmatprep.subr.mxu0 %v256
    %472 = vmatpush1.msra.mxu0 %v255
    %473 = vmatprep.subr.mxu0 %v260
    %474 = vmatpush1.msra.mxu0 %v259
    %475 = vmatprep.subr.mxu0 %v264
    %476 = vmatpush1.msra.mxu0 %v263
    %477 = vmatprep.subr.mxu0 %v268
    %478 = vmatpush1.msra.mxu0 %v267
    %479 = vmatprep.subr.mxu0 %v272
    %480 = vmatpush1.msra.mxu0 %v271
    %481 = vmatprep.subr.mxu0 %v276
    %482 = vmatpush1.msra.mxu0 %v275
    %483 = vmatprep.subr.mxu0 %v280
    %484 = vmatpush1.msra.mxu0 %v279
    %485 = vmatprep.subr.mxu0 %v284
    %486 = vmatpush1.msra.mxu0 %v283
    %487 = vmatprep.subr.mxu0 %v288
    %488 = vmatpush1.msra.mxu0 %v287
    %489 = vmatprep.subr.mxu0 %v292
    %490 = vmatpush1.msra.mxu0 %v291
    %491 = vmatprep.subr.mxu0 %v296
    %492 = vmatpush1.msra.mxu0 %v295
    %493 = vmatprep.subr.mxu0 %v300
    %494 = vmatpush1.msra.mxu0 %v299
    %495 = vmatprep.subr.mxu0 %v304
    %496 = vmatpush1.msra.mxu0 %v303
    %497 = vmatprep.subr.mxu0 %v308
    %498 = vmatpush1.msra.mxu0 %v307
    %499 = vmatprep.subr.mxu0 %v312
    %500 = vmatpush1.msra.mxu0 %v311
    %501 = vmatprep.subr.mxu0 %v316
    %502 = vmatpush1.msra.mxu0 %v315
    %503 = vmatprep.subr.mxu0 %v320
    %504 = vmatpush1.msra.mxu0 %v319
    %505 = vmatprep.subr.mxu0 %v324
    %506 = vmatpush1.msra.mxu0 %v323
    %507 = vmatprep.subr.mxu0 %v328
    %508 = vmatpush1.msra.mxu0 %v327
    %509 = vmatprep.subr.mxu0 %v332
    %510 = vmatpush1.msra.mxu0 %v331
    %511 = vmatprep.subr.mxu0 %v336
    %512 = vmatpush1.msra.mxu0 %v335
    %513 = vmatprep.subr.mxu0 %v340
    %514 = vmatpush1.msra.mxu0 %v339
    %515 = vmatprep.subr.mxu0 %v344
    %516 = vmatpush1.msra.mxu0 %v343
    %517 = vmatprep.subr.mxu0 %v348
    %518 = vmatpush1.msra.mxu0 %v347
    %519 = vmatprep.subr.mxu0 %v352
    %520 = vmatpush1.msra.mxu0 %v351
    %521 = vmatprep.mubr.f32.mxu0 %v383
    %522 = vmatmul.mubr.f32.gmra.mrb[0].mxu0 %v382
    %v523 = vpop.f32.mrb[0].mxu0
    %v524 = vadd.f32 %v366, %v523
    %v525 = vpop.f32.mrb[0].mxu0
    %v526 = vadd.f32 %v370, %v525
    %527 = vdwg.mxu0
    %v528 = vld [vmem:[%s3] sm:$0xff]
    %v529 = vld [vmem:[%s3 + $0x8] sm:$0xff]
    %v530 = vld [vmem:[%s3 + $0x10] sm:$0xff]
    %v531 = vld [vmem:[%s3 + $0x18] sm:$0xff]
    %v532 = vld [vmem:[%s3 + $0x20] sm:$0xff]
    %v533 = vld [vmem:[%s3 + $0x28] sm:$0xff]
    %v534 = vld [vmem:[%s3 + $0x30] sm:$0xff]
    %v535 = vld [vmem:[%s3 + $0x38] sm:$0xff]
    %v536 = vld [vmem:[%s3 + $0x40] sm:$0xff]
    %v537 = vld [vmem:[%s3 + $0x48] sm:$0xff]
    %v538 = vld [vmem:[%s3 + $0x50] sm:$0xff]
    %v539 = vld [vmem:[%s3 + $0x58] sm:$0xff]
    %v540 = vld [vmem:[%s3 + $0x60] sm:$0xff]
    %v541 = vld [vmem:[%s3 + $0x68] sm:$0xff]
    %v542 = vld [vmem:[%s3 + $0x70] sm:$0xff]
    %v543 = vld [vmem:[%s3 + $0x78] sm:$0xff]
    %v544 = vld [vmem:[%s3 + $0x80] sm:$0xff]
    %v545 = vld [vmem:[%s3 + $0x88] sm:$0xff]
    %v546 = vld [vmem:[%s3 + $0x90] sm:$0xff]
    %v547 = vld [vmem:[%s3 + $0x98] sm:$0xff]
    %v548 = vld [vmem:[%s3 + $0xa0] sm:$0xff]
    %v549 = vld [vmem:[%s3 + $0xa8] sm:$0xff]
    %v550 = vld [vmem:[%s3 + $0xb0] sm:$0xff]
    %v551 = vld [vmem:[%s3 + $0xb8] sm:$0xff]
    %v552 = vld [vmem:[%s3 + $0xc0] sm:$0xff]
    %v553 = vld [vmem:[%s3 + $0xc8] sm:$0xff]
    %v554 = vld [vmem:[%s3 + $0xd0] sm:$0xff]
    %v555 = vld [vmem:[%s3 + $0xd8] sm:$0xff]
    %v556 = vld [vmem:[%s3 + $0xe0] sm:$0xff]
    %v557 = vld [vmem:[%s3 + $0xe8] sm:$0xff]
    %v558 = vld [vmem:[%s3 + $0xf0] sm:$0xff]
    %v559 = vld [vmem:[%s3 + $0xf8] sm:$0xff]
    %v560 = vld [vmem:[%s3 + $0x100] sm:$0xff]
    %v561 = vld [vmem:[%s3 + $0x108] sm:$0xff]
    %v562 = vld [vmem:[%s3 + $0x110] sm:$0xff]
    %v563 = vld [vmem:[%s3 + $0x118] sm:$0xff]
    %v564 = vld [vmem:[%s3 + $0x120] sm:$0xff]
    %v565 = vld [vmem:[%s3 + $0x128] sm:$0xff]
    %v566 = vld [vmem:[%s3 + $0x130] sm:$0xff]
    %v567 = vld [vmem:[%s3 + $0x138] sm:$0xff]
    %v568 = vld [vmem:[%s3 + $0x140] sm:$0xff]
    %v569 = vld [vmem:[%s3 + $0x148] sm:$0xff]
    %v570 = vld [vmem:[%s3 + $0x150] sm:$0xff]
    %v571 = vld [vmem:[%s3 + $0x158] sm:$0xff]
    %v572 = vld [vmem:[%s3 + $0x160] sm:$0xff]
    %v573 = vld [vmem:[%s3 + $0x168] sm:$0xff]
    %v574 = vld [vmem:[%s3 + $0x170] sm:$0xff]
    %v575 = vld [vmem:[%s3 + $0x178] sm:$0xff]
    %v576 = vld [vmem:[%s3 + $0x180] sm:$0xff]
    %v577 = vld [vmem:[%s3 + $0x188] sm:$0xff]
    %v578 = vld [vmem:[%s3 + $0x190] sm:$0xff]
    %v579 = vld [vmem:[%s3 + $0x198] sm:$0xff]
    %v580 = vld [vmem:[%s3 + $0x1a0] sm:$0xff]
    %v581 = vld [vmem:[%s3 + $0x1a8] sm:$0xff]
    %v582 = vld [vmem:[%s3 + $0x1b0] sm:$0xff]
    %v583 = vld [vmem:[%s3 + $0x1b8] sm:$0xff]
    %v584 = vld [vmem:[%s3 + $0x1c0] sm:$0xff]
    %v585 = vld [vmem:[%s3 + $0x1c8] sm:$0xff]
    %v586 = vld [vmem:[%s3 + $0x1d0] sm:$0xff]
    %v587 = vld [vmem:[%s3 + $0x1d8] sm:$0xff]
    %v588 = vld [vmem:[%s3 + $0x1e0] sm:$0xff]
    %v589 = vld [vmem:[%s3 + $0x1e8] sm:$0xff]
    %v590 = vld [vmem:[%s3 + $0x1f0] sm:$0xff]
    %v591 = vld [vmem:[%s3 + $0x1f8] sm:$0xff]
    %v592 = vld [vmem:[%s3 + $0x200] sm:$0xff]
    %v593 = vld [vmem:[%s3 + $0x208] sm:$0xff]
    %v594 = vld [vmem:[%s3 + $0x210] sm:$0xff]
    %v595 = vld [vmem:[%s3 + $0x218] sm:$0xff]
    %v596 = vld [vmem:[%s3 + $0x220] sm:$0xff]
    %v597 = vld [vmem:[%s3 + $0x228] sm:$0xff]
    %v598 = vld [vmem:[%s3 + $0x230] sm:$0xff]
    %v599 = vld [vmem:[%s3 + $0x238] sm:$0xff]
    %v600 = vld [vmem:[%s3 + $0x240] sm:$0xff]
    %v601 = vld [vmem:[%s3 + $0x248] sm:$0xff]
    %v602 = vld [vmem:[%s3 + $0x250] sm:$0xff]
    %v603 = vld [vmem:[%s3 + $0x258] sm:$0xff]
    %v604 = vld [vmem:[%s3 + $0x260] sm:$0xff]
    %v605 = vld [vmem:[%s3 + $0x268] sm:$0xff]
    %v606 = vld [vmem:[%s3 + $0x270] sm:$0xff]
    %v607 = vld [vmem:[%s3 + $0x278] sm:$0xff]
    %v608 = vld [vmem:[%s3 + $0x280] sm:$0xff]
    %v609 = vld [vmem:[%s3 + $0x288] sm:$0xff]
    %v610 = vld [vmem:[%s3 + $0x290] sm:$0xff]
    %v611 = vld [vmem:[%s3 + $0x298] sm:$0xff]
    %v612 = vld [vmem:[%s3 + $0x2a0] sm:$0xff]
    %v613 = vld [vmem:[%s3 + $0x2a8] sm:$0xff]
    %v614 = vld [vmem:[%s3 + $0x2b0] sm:$0xff]
    %v615 = vld [vmem:[%s3 + $0x2b8] sm:$0xff]
    %v616 = vld [vmem:[%s3 + $0x2c0] sm:$0xff]
    %v617 = vld [vmem:[%s3 + $0x2c8] sm:$0xff]
    %v618 = vld [vmem:[%s3 + $0x2d0] sm:$0xff]
    %v619 = vld [vmem:[%s3 + $0x2d8] sm:$0xff]
    %v620 = vld [vmem:[%s3 + $0x2e0] sm:$0xff]
    %v621 = vld [vmem:[%s3 + $0x2e8] sm:$0xff]
    %v622 = vld [vmem:[%s3 + $0x2f0] sm:$0xff]
    %v623 = vld [vmem:[%s3 + $0x2f8] sm:$0xff]
    %v624 = vld [vmem:[%s3 + $0x300] sm:$0xff]
    %v625 = vld [vmem:[%s3 + $0x308] sm:$0xff]
    %v626 = vld [vmem:[%s3 + $0x310] sm:$0xff]
    %v627 = vld [vmem:[%s3 + $0x318] sm:$0xff]
    %v628 = vld [vmem:[%s3 + $0x320] sm:$0xff]
    %v629 = vld [vmem:[%s3 + $0x328] sm:$0xff]
    %v630 = vld [vmem:[%s3 + $0x330] sm:$0xff]
    %v631 = vld [vmem:[%s3 + $0x338] sm:$0xff]
    %v632 = vld [vmem:[%s3 + $0x340] sm:$0xff]
    %v633 = vld [vmem:[%s3 + $0x348] sm:$0xff]
    %v634 = vld [vmem:[%s3 + $0x350] sm:$0xff]
    %v635 = vld [vmem:[%s3 + $0x358] sm:$0xff]
    %v636 = vld [vmem:[%s3 + $0x360] sm:$0xff]
    %v637 = vld [vmem:[%s3 + $0x368] sm:$0xff]
    %v638 = vld [vmem:[%s3 + $0x370] sm:$0xff]
    %v639 = vld [vmem:[%s3 + $0x378] sm:$0xff]
    %v640 = vld [vmem:[%s3 + $0x380] sm:$0xff]
    %v641 = vld [vmem:[%s3 + $0x388] sm:$0xff]
    %v642 = vld [vmem:[%s3 + $0x390] sm:$0xff]
    %v643 = vld [vmem:[%s3 + $0x398] sm:$0xff]
    %v644 = vld [vmem:[%s3 + $0x3a0] sm:$0xff]
    %v645 = vld [vmem:[%s3 + $0x3a8] sm:$0xff]
    %v646 = vld [vmem:[%s3 + $0x3b0] sm:$0xff]
    %v647 = vld [vmem:[%s3 + $0x3b8] sm:$0xff]
    %v648 = vld [vmem:[%s3 + $0x3c0] sm:$0xff]
    %v649 = vld [vmem:[%s3 + $0x3c8] sm:$0xff]
    %v650 = vld [vmem:[%s3 + $0x3d0] sm:$0xff]
    %v651 = vld [vmem:[%s3 + $0x3d8] sm:$0xff]
    %v652 = vld [vmem:[%s3 + $0x3e0] sm:$0xff]
    %v653 = vld [vmem:[%s3 + $0x3e8] sm:$0xff]
    %v654 = vld [vmem:[%s3 + $0x3f0] sm:$0xff]
    %v655 = vld [vmem:[%s3 + $0x3f8] sm:$0xff]
    %v656 = vld [vmem:[%s3 + $0x400] sm:$0xff]
    %v657 = vld [vmem:[%s3 + $0x408] sm:$0xff]
    %v658 = vld [vmem:[%s3 + $0x410] sm:$0xff]
    %v659 = vld [vmem:[%s3 + $0x418] sm:$0xff]
    %v660 = vld [vmem:[%s3 + $0x420] sm:$0xff]
    %v661 = vld [vmem:[%s3 + $0x428] sm:$0xff]
    %v662 = vld [vmem:[%s3 + $0x430] sm:$0xff]
    %v663 = vld [vmem:[%s3 + $0x438] sm:$0xff]
    %v664 = vld [vmem:[%s3 + $0x440] sm:$0xff]
    %v665 = vld [vmem:[%s3 + $0x448] sm:$0xff]
    %v666 = vld [vmem:[%s3 + $0x450] sm:$0xff]
    %v667 = vld [vmem:[%s3 + $0x458] sm:$0xff]
    %v668 = vld [vmem:[%s3 + $0x460] sm:$0xff]
    %v669 = vld [vmem:[%s3 + $0x468] sm:$0xff]
    %v670 = vld [vmem:[%s3 + $0x470] sm:$0xff]
    %v671 = vld [vmem:[%s3 + $0x478] sm:$0xff]
    %v672 = vld [vmem:[%s3 + $0x480] sm:$0xff]
    %v673 = vld [vmem:[%s3 + $0x488] sm:$0xff]
    %v674 = vld [vmem:[%s3 + $0x490] sm:$0xff]
    %v675 = vld [vmem:[%s3 + $0x498] sm:$0xff]
    %v676 = vld [vmem:[%s3 + $0x4a0] sm:$0xff]
    %v677 = vld [vmem:[%s3 + $0x4a8] sm:$0xff]
    %v678 = vld [vmem:[%s3 + $0x4b0] sm:$0xff]
    %v679 = vld [vmem:[%s3 + $0x4b8] sm:$0xff]
    %v680 = vld [vmem:[%s3 + $0x4c0] sm:$0xff]
    %v681 = vld [vmem:[%s3 + $0x4c8] sm:$0xff]
    %v682 = vld [vmem:[%s3 + $0x4d0] sm:$0xff]
    %v683 = vld [vmem:[%s3 + $0x4d8] sm:$0xff]
    %v684 = vld [vmem:[%s3 + $0x4e0] sm:$0xff]
    %v685 = vld [vmem:[%s3 + $0x4e8] sm:$0xff]
    %v686 = vld [vmem:[%s3 + $0x4f0] sm:$0xff]
    %v687 = vld [vmem:[%s3 + $0x4f8] sm:$0xff]
    %v688 = vld [vmem:[%s3 + $0x500] sm:$0xff]
    %v689 = vld [vmem:[%s3 + $0x508] sm:$0xff]
    %v690 = vld [vmem:[%s3 + $0x510] sm:$0xff]
    %v691 = vld [vmem:[%s3 + $0x518] sm:$0xff]
    %v692 = vld [vmem:[%s3 + $0x520] sm:$0xff]
    %v693 = vld [vmem:[%s3 + $0x528] sm:$0xff]
    %v694 = vld [vmem:[%s3 + $0x530] sm:$0xff]
    %v695 = vld [vmem:[%s3 + $0x538] sm:$0xff]
    %v696 = vld [vmem:[%s3 + $0x540] sm:$0xff]
    %v697 = vld [vmem:[%s3 + $0x548] sm:$0xff]
    %v698 = vld [vmem:[%s3 + $0x550] sm:$0xff]
    %v699 = vld [vmem:[%s3 + $0x558] sm:$0xff]
    %v700 = vld [vmem:[%s3 + $0x560] sm:$0xff]
    %v701 = vld [vmem:[%s3 + $0x568] sm:$0xff]
    %v702 = vld [vmem:[%s3 + $0x570] sm:$0xff]
    %v703 = vld [vmem:[%s3 + $0x578] sm:$0xff]
    %v704 = vld [vmem:[%s3 + $0x580] sm:$0xff]
    %v705 = vld [vmem:[%s3 + $0x588] sm:$0xff]
    %v706 = vld [vmem:[%s3 + $0x590] sm:$0xff]
    %v707 = vld [vmem:[%s3 + $0x598] sm:$0xff]
    %v708 = vld [vmem:[%s3 + $0x5a0] sm:$0xff]
    %v709 = vld [vmem:[%s3 + $0x5a8] sm:$0xff]
    %v710 = vld [vmem:[%s3 + $0x5b0] sm:$0xff]
    %v711 = vld [vmem:[%s3 + $0x5b8] sm:$0xff]
    %v712 = vld [vmem:[%s3 + $0x5c0] sm:$0xff]
    %v713 = vld [vmem:[%s3 + $0x5c8] sm:$0xff]
    %v714 = vld [vmem:[%s3 + $0x5d0] sm:$0xff]
    %v715 = vld [vmem:[%s3 + $0x5d8] sm:$0xff]
    %v716 = vld [vmem:[%s3 + $0x5e0] sm:$0xff]
    %v717 = vld [vmem:[%s3 + $0x5e8] sm:$0xff]
    %v718 = vld [vmem:[%s3 + $0x5f0] sm:$0xff]
    %v719 = vld [vmem:[%s3 + $0x5f8] sm:$0xff]
    %v720 = vld [vmem:[%s3 + $0x600] sm:$0xff]
    %v721 = vld [vmem:[%s3 + $0x608] sm:$0xff]
    %v722 = vld [vmem:[%s3 + $0x610] sm:$0xff]
    %v723 = vld [vmem:[%s3 + $0x618] sm:$0xff]
    %v724 = vld [vmem:[%s3 + $0x620] sm:$0xff]
    %v725 = vld [vmem:[%s3 + $0x628] sm:$0xff]
    %v726 = vld [vmem:[%s3 + $0x630] sm:$0xff]
    %v727 = vld [vmem:[%s3 + $0x638] sm:$0xff]
    %v728 = vld [vmem:[%s3 + $0x640] sm:$0xff]
    %v729 = vld [vmem:[%s3 + $0x648] sm:$0xff]
    %v730 = vld [vmem:[%s3 + $0x650] sm:$0xff]
    %v731 = vld [vmem:[%s3 + $0x658] sm:$0xff]
    %v732 = vld [vmem:[%s3 + $0x660] sm:$0xff]
    %v733 = vld [vmem:[%s3 + $0x668] sm:$0xff]
    %v734 = vld [vmem:[%s3 + $0x670] sm:$0xff]
    %v735 = vld [vmem:[%s3 + $0x678] sm:$0xff]
    %v736 = vld [vmem:[%s3 + $0x680] sm:$0xff]
    %v737 = vld [vmem:[%s3 + $0x688] sm:$0xff]
    %v738 = vld [vmem:[%s3 + $0x690] sm:$0xff]
    %v739 = vld [vmem:[%s3 + $0x698] sm:$0xff]
    %v740 = vld [vmem:[%s3 + $0x6a0] sm:$0xff]
    %v741 = vld [vmem:[%s3 + $0x6a8] sm:$0xff]
    %v742 = vld [vmem:[%s3 + $0x6b0] sm:$0xff]
    %v743 = vld [vmem:[%s3 + $0x6b8] sm:$0xff]
    %v744 = vld [vmem:[%s3 + $0x6c0] sm:$0xff]
    %v745 = vld [vmem:[%s3 + $0x6c8] sm:$0xff]
    %v746 = vld [vmem:[%s3 + $0x6d0] sm:$0xff]
    %v747 = vld [vmem:[%s3 + $0x6d8] sm:$0xff]
    %v748 = vld [vmem:[%s3 + $0x6e0] sm:$0xff]
    %v749 = vld [vmem:[%s3 + $0x6e8] sm:$0xff]
    %v750 = vld [vmem:[%s3 + $0x6f0] sm:$0xff]
    %v751 = vld [vmem:[%s3 + $0x6f8] sm:$0xff]
    %v752 = vld [vmem:[%s3 + $0x700] sm:$0xff]
    %v753 = vld [vmem:[%s3 + $0x708] sm:$0xff]
    %v754 = vld [vmem:[%s3 + $0x710] sm:$0xff]
    %v755 = vld [vmem:[%s3 + $0x718] sm:$0xff]
    %v756 = vld [vmem:[%s3 + $0x720] sm:$0xff]
    %v757 = vld [vmem:[%s3 + $0x728] sm:$0xff]
    %v758 = vld [vmem:[%s3 + $0x730] sm:$0xff]
    %v759 = vld [vmem:[%s3 + $0x738] sm:$0xff]
    %v760 = vld [vmem:[%s3 + $0x740] sm:$0xff]
    %v761 = vld [vmem:[%s3 + $0x748] sm:$0xff]
    %v762 = vld [vmem:[%s3 + $0x750] sm:$0xff]
    %v763 = vld [vmem:[%s3 + $0x758] sm:$0xff]
    %v764 = vld [vmem:[%s3 + $0x760] sm:$0xff]
    %v765 = vld [vmem:[%s3 + $0x768] sm:$0xff]
    %v766 = vld [vmem:[%s3 + $0x770] sm:$0xff]
    %v767 = vld [vmem:[%s3 + $0x778] sm:$0xff]
    %v768 = vld [vmem:[%s3 + $0x780] sm:$0xff]
    %v769 = vld [vmem:[%s3 + $0x788] sm:$0xff]
    %v770 = vld [vmem:[%s3 + $0x790] sm:$0xff]
    %v771 = vld [vmem:[%s3 + $0x798] sm:$0xff]
    %v772 = vld [vmem:[%s3 + $0x7a0] sm:$0xff]
    %v773 = vld [vmem:[%s3 + $0x7a8] sm:$0xff]
    %v774 = vld [vmem:[%s3 + $0x7b0] sm:$0xff]
    %v775 = vld [vmem:[%s3 + $0x7b8] sm:$0xff]
    %v776 = vld [vmem:[%s3 + $0x7c0] sm:$0xff]
    %v777 = vld [vmem:[%s3 + $0x7c8] sm:$0xff]
    %v778 = vld [vmem:[%s3 + $0x7d0] sm:$0xff]
    %v779 = vld [vmem:[%s3 + $0x7d8] sm:$0xff]
    %v780 = vld [vmem:[%s3 + $0x7e0] sm:$0xff]
    %v781 = vld [vmem:[%s3 + $0x7e8] sm:$0xff]
    %v782 = vld [vmem:[%s3 + $0x7f0] sm:$0xff]
    %v783 = vld [vmem:[%s3 + $0x7f8] sm:$0xff]
    %v784 = vld [vmem:[%s5] sm:$0xf]
    %v786 = vlaneseq
    %v787 = vshrl.u32 %v786, 7
    %v788 = vsub.s32 0, %v787
    %v789 = vrot.slane %v784, %v788
    %v790 = vlaneseq
    %v791 = vshrl.u32 %v790, 7
    %v792 = vsub.s32 1, %v791
    %v793 = vrot.slane %v784, %v792
    %v794 = vlaneseq
    %v795 = vshrl.u32 %v794, 7
    %v796 = vsub.s32 2, %v795
    %v797 = vrot.slane %v784, %v796
    %v798 = vlaneseq
    %v799 = vshrl.u32 %v798, 7
    %v800 = vsub.s32 3, %v799
    %v801 = vrot.slane %v784, %v800
    %v807 = vcombine.high %v109, %v109
    %v809 = vunpack.c.l.s4 1983009808
    %v810 = vunpack.c.0.s8 %v809
    %v811 = vlaneseq
    %v812 = vshrl.u32 %v811, 7
    %v813 = vsub.s32 %v810, %v812
    %v814 = vrot.slane %v109, %v813
    %v816 = vunpack.c.l.s4 1983009808
    %v817 = vunpack.c.0.s8 %v816
    %v818 = vlaneseq
    %v819 = vshrl.u32 %v818, 7
    %v820 = vsub.s32 %v817, %v819
    %v821 = vrot.slane %v807, %v820
    %v822 = vcombine.high %v814, %v814
    %v823 = vcombine.high %v821, %v821
    %828 = vmatprep.subr.mxu0 %v529
    %829 = vmatpush1.msra.mxu0 %v528
    %830 = vmatprep.subr.mxu0 %v533
    %831 = vmatpush1.msra.mxu0 %v532
    %832 = vmatprep.subr.mxu0 %v537
    %833 = vmatpush1.msra.mxu0 %v536
    %834 = vmatprep.subr.mxu0 %v541
    %835 = vmatpush1.msra.mxu0 %v540
    %836 = vmatprep.subr.mxu0 %v545
    %837 = vmatpush1.msra.mxu0 %v544
    %838 = vmatprep.subr.mxu0 %v549
    %839 = vmatpush1.msra.mxu0 %v548
    %840 = vmatprep.subr.mxu0 %v553
    %841 = vmatpush1.msra.mxu0 %v552
    %842 = vmatprep.subr.mxu0 %v557
    %843 = vmatpush1.msra.mxu0 %v556
    %844 = vmatprep.subr.mxu0 %v561
    %845 = vmatpush1.msra.mxu0 %v560
    %846 = vmatprep.subr.mxu0 %v565
    %847 = vmatpush1.msra.mxu0 %v564
    %848 = vmatprep.subr.mxu0 %v569
    %849 = vmatpush1.msra.mxu0 %v568
    %850 = vmatprep.subr.mxu0 %v573
    %851 = vmatpush1.msra.mxu0 %v572
    %852 = vmatprep.subr.mxu0 %v577
    %853 = vmatpush1.msra.mxu0 %v576
    %854 = vmatprep.subr.mxu0 %v581
    %855 = vmatpush1.msra.mxu0 %v580
    %856 = vmatprep.subr.mxu0 %v585
    %857 = vmatpush1.msra.mxu0 %v584
    %858 = vmatprep.subr.mxu0 %v589
    %859 = vmatpush1.msra.mxu0 %v588
    %860 = vmatprep.subr.mxu0 %v593
    %861 = vmatpush1.msra.mxu0 %v592
    %862 = vmatprep.subr.mxu0 %v597
    %863 = vmatpush1.msra.mxu0 %v596
    %864 = vmatprep.subr.mxu0 %v601
    %865 = vmatpush1.msra.mxu0 %v600
    %866 = vmatprep.subr.mxu0 %v605
    %867 = vmatpush1.msra.mxu0 %v604
    %868 = vmatprep.subr.mxu0 %v609
    %869 = vmatpush1.msra.mxu0 %v608
    %870 = vmatprep.subr.mxu0 %v613
    %871 = vmatpush1.msra.mxu0 %v612
    %872 = vmatprep.subr.mxu0 %v617
    %873 = vmatpush1.msra.mxu0 %v616
    %874 = vmatprep.subr.mxu0 %v621
    %875 = vmatpush1.msra.mxu0 %v620
    %876 = vmatprep.subr.mxu0 %v625
    %877 = vmatpush1.msra.mxu0 %v624
    %878 = vmatprep.subr.mxu0 %v629
    %879 = vmatpush1.msra.mxu0 %v628
    %880 = vmatprep.subr.mxu0 %v633
    %881 = vmatpush1.msra.mxu0 %v632
    %882 = vmatprep.subr.mxu0 %v637
    %883 = vmatpush1.msra.mxu0 %v636
    %884 = vmatprep.subr.mxu0 %v641
    %885 = vmatpush1.msra.mxu0 %v640
    %886 = vmatprep.subr.mxu0 %v645
    %887 = vmatpush1.msra.mxu0 %v644
    %888 = vmatprep.subr.mxu0 %v649
    %889 = vmatpush1.msra.mxu0 %v648
    %890 = vmatprep.subr.mxu0 %v653
    %891 = vmatpush1.msra.mxu0 %v652
    %892 = vmatprep.mubr.f32.mxu0 %v822
    %893 = vmatmul.mubr.f32.gmra.mrb[0].mxu0 %v814
    %v894 = vpop.f32.mrb[0].mxu0
    %v895 = vadd.f32 %v789, %v894
    %v896 = vpop.f32.mrb[0].mxu0
    %v897 = vadd.f32 %v793, %v896
    %898 = vdwg.mxu0
    %899 = vmatprep.subr.mxu0 %v657
    %900 = vmatpush1.msra.mxu0 %v656
    %901 = vmatprep.subr.mxu0 %v661
    %902 = vmatpush1.msra.mxu0 %v660
    %903 = vmatprep.subr.mxu0 %v665
    %904 = vmatpush1.msra.mxu0 %v664
    %905 = vmatprep.subr.mxu0 %v669
    %906 = vmatpush1.msra.mxu0 %v668
    %907 = vmatprep.subr.mxu0 %v673
    %908 = vmatpush1.msra.mxu0 %v672
    %909 = vmatprep.subr.mxu0 %v677
    %910 = vmatpush1.msra.mxu0 %v676
    %911 = vmatprep.subr.mxu0 %v681
    %912 = vmatpush1.msra.mxu0 %v680
    %913 = vmatprep.subr.mxu0 %v685
    %914 = vmatpush1.msra.mxu0 %v684
    %915 = vmatprep.subr.mxu0 %v689
    %916 = vmatpush1.msra.mxu0 %v688
    %917 = vmatprep.subr.mxu0 %v693
    %918 = vmatpush1.msra.mxu0 %v692
    %919 = vmatprep.subr.mxu0 %v697
    %920 = vmatpush1.msra.mxu0 %v696
    %921 = vmatprep.subr.mxu0 %v701
    %922 = vmatpush1.msra.mxu0 %v700
    %923 = vmatprep.subr.mxu0 %v705
    %924 = vmatpush1.msra.mxu0 %v704
    %925 = vmatprep.subr.mxu0 %v709
    %926 = vmatpush1.msra.mxu0 %v708
    %927 = vmatprep.subr.mxu0 %v713
    %928 = vmatpush1.msra.mxu0 %v712
    %929 = vmatprep.subr.mxu0 %v717
    %930 = vmatpush1.msra.mxu0 %v716
    %931 = vmatprep.subr.mxu0 %v721
    %932 = vmatpush1.msra.mxu0 %v720
    %933 = vmatprep.subr.mxu0 %v725
    %934 = vmatpush1.msra.mxu0 %v724
    %935 = vmatprep.subr.mxu0 %v729
    %936 = vmatpush1.msra.mxu0 %v728
    %937 = vmatprep.subr.mxu0 %v733
    %938 = vmatpush1.msra.mxu0 %v732
    %939 = vmatprep.subr.mxu0 %v737
    %940 = vmatpush1.msra.mxu0 %v736
    %941 = vmatprep.subr.mxu0 %v741
    %942 = vmatpush1.msra.mxu0 %v740
    %943 = vmatprep.subr.mxu0 %v745
    %944 = vmatpush1.msra.mxu0 %v744
    %945 = vmatprep.subr.mxu0 %v749
    %946 = vmatpush1.msra.mxu0 %v748
    %947 = vmatprep.subr.mxu0 %v753
    %948 = vmatpush1.msra.mxu0 %v752
    %949 = vmatprep.subr.mxu0 %v757
    %950 = vmatpush1.msra.mxu0 %v756
    %951 = vmatprep.subr.mxu0 %v761
    %952 = vmatpush1.msra.mxu0 %v760
    %953 = vmatprep.subr.mxu0 %v765
    %954 = vmatpush1.msra.mxu0 %v764
    %955 = vmatprep.subr.mxu0 %v769
    %956 = vmatpush1.msra.mxu0 %v768
    %957 = vmatprep.subr.mxu0 %v773
    %958 = vmatpush1.msra.mxu0 %v772
    %959 = vmatprep.subr.mxu0 %v777
    %960 = vmatpush1.msra.mxu0 %v776
    %961 = vmatprep.subr.mxu0 %v781
    %962 = vmatpush1.msra.mxu0 %v780
    %963 = vmatprep.mubr.f32.mxu0 %v823
    %964 = vmatmul.mubr.f32.gmra.mrb[0].mxu0 %v821
    %v965 = vpop.f32.mrb[0].mxu0
    %v966 = vadd.f32 %v895, %v965
    %v967 = vpop.f32.mrb[0].mxu0
    %v968 = vadd.f32 %v897, %v967
    %969 = vdwg.mxu0
    %970 = vmatprep.subr.mxu0 %v531
    %971 = vmatpush1.msra.mxu0 %v530
    %972 = vmatprep.subr.mxu0 %v535
    %973 = vmatpush1.msra.mxu0 %v534
    %974 = vmatprep.subr.mxu0 %v539
    %975 = vmatpush1.msra.mxu0 %v538
    %976 = vmatprep.subr.mxu0 %v543
    %977 = vmatpush1.msra.mxu0 %v542
    %978 = vmatprep.subr.mxu0 %v547
    %979 = vmatpush1.msra.mxu0 %v546
    %980 = vmatprep.subr.mxu0 %v551
    %981 = vmatpush1.msra.mxu0 %v550
    %982 = vmatprep.subr.mxu0 %v555
    %983 = vmatpush1.msra.mxu0 %v554
    %984 = vmatprep.subr.mxu0 %v559
    %985 = vmatpush1.msra.mxu0 %v558
    %986 = vmatprep.subr.mxu0 %v563
    %987 = vmatpush1.msra.mxu0 %v562
    %988 = vmatprep.subr.mxu0 %v567
    %989 = vmatpush1.msra.mxu0 %v566
    %990 = vmatprep.subr.mxu0 %v571
    %991 = vmatpush1.msra.mxu0 %v570
    %992 = vmatprep.subr.mxu0 %v575
    %993 = vmatpush1.msra.mxu0 %v574
    %994 = vmatprep.subr.mxu0 %v579
    %995 = vmatpush1.msra.mxu0 %v578
    %996 = vmatprep.subr.mxu0 %v583
    %997 = vmatpush1.msra.mxu0 %v582
    %998 = vmatprep.subr.mxu0 %v587
    %999 = vmatpush1.msra.mxu0 %v586
    %1000 = vmatprep.subr.mxu0 %v591
    %1001 = vmatpush1.msra.mxu0 %v590
    %1002 = vmatprep.subr.mxu0 %v595
    %1003 = vmatpush1.msra.mxu0 %v594
    %1004 = vmatprep.subr.mxu0 %v599
    %1005 = vmatpush1.msra.mxu0 %v598
    %1006 = vmatprep.subr.mxu0 %v603
    %1007 = vmatpush1.msra.mxu0 %v602
    %1008 = vmatprep.subr.mxu0 %v607
    %1009 = vmatpush1.msra.mxu0 %v606
    %1010 = vmatprep.subr.mxu0 %v611
    %1011 = vmatpush1.msra.mxu0 %v610
    %1012 = vmatprep.subr.mxu0 %v615
    %1013 = vmatpush1.msra.mxu0 %v614
    %1014 = vmatprep.subr.mxu0 %v619
    %1015 = vmatpush1.msra.mxu0 %v618
    %1016 = vmatprep.subr.mxu0 %v623
    %1017 = vmatpush1.msra.mxu0 %v622
    %1018 = vmatprep.subr.mxu0 %v627
    %1019 = vmatpush1.msra.mxu0 %v626
    %1020 = vmatprep.subr.mxu0 %v631
    %1021 = vmatpush1.msra.mxu0 %v630
    %1022 = vmatprep.subr.mxu0 %v635
    %1023 = vmatpush1.msra.mxu0 %v634
    %1024 = vmatprep.subr.mxu0 %v639
    %1025 = vmatpush1.msra.mxu0 %v638
    %1026 = vmatprep.subr.mxu0 %v643
    %1027 = vmatpush1.msra.mxu0 %v642
    %1028 = vmatprep.subr.mxu0 %v647
    %1029 = vmatpush1.msra.mxu0 %v646
    %1030 = vmatprep.subr.mxu0 %v651
    %1031 = vmatpush1.msra.mxu0 %v650
    %1032 = vmatprep.subr.mxu0 %v655
    %1033 = vmatpush1.msra.mxu0 %v654
    %1034 = vmatprep.mubr.f32.mxu0 %v822
    %1035 = vmatmul.mubr.f32.gmra.mrb[0].mxu0 %v814
    %v1036 = vpop.f32.mrb[0].mxu0
    %v1037 = vadd.f32 %v797, %v1036
    %v1038 = vpop.f32.mrb[0].mxu0
    %v1039 = vadd.f32 %v801, %v1038
    %1040 = vdwg.mxu0
    %1041 = vmatprep.subr.mxu0 %v659
    %1042 = vmatpush1.msra.mxu0 %v658
    %1043 = vmatprep.subr.mxu0 %v663
    %1044 = vmatpush1.msra.mxu0 %v662
    %1045 = vmatprep.subr.mxu0 %v667
    %1046 = vmatpush1.msra.mxu0 %v666
    %1047 = vmatprep.subr.mxu0 %v671
    %1048 = vmatpush1.msra.mxu0 %v670
    %1049 = vmatprep.subr.mxu0 %v675
    %1050 = vmatpush1.msra.mxu0 %v674
    %1051 = vmatprep.subr.mxu0 %v679
    %1052 = vmatpush1.msra.mxu0 %v678
    %1053 = vmatprep.subr.mxu0 %v683
    %1054 = vmatpush1.msra.mxu0 %v682
    %1055 = vmatprep.subr.mxu0 %v687
    %1056 = vmatpush1.msra.mxu0 %v686
    %1057 = vmatprep.subr.mxu0 %v691
    %1058 = vmatpush1.msra.mxu0 %v690
    %1059 = vmatprep.subr.mxu0 %v695
    %1060 = vmatpush1.msra.mxu0 %v694
    %1061 = vmatprep.subr.mxu0 %v699
    %1062 = vmatpush1.msra.mxu0 %v698
    %1063 = vmatprep.subr.mxu0 %v703
    %1064 = vmatpush1.msra.mxu0 %v702
    %1065 = vmatprep.subr.mxu0 %v707
    %1066 = vmatpush1.msra.mxu0 %v706
    %1067 = vmatprep.subr.mxu0 %v711
    %1068 = vmatpush1.msra.mxu0 %v710
    %1069 = vmatprep.subr.mxu0 %v715
    %1070 = vmatpush1.msra.mxu0 %v714
    %1071 = vmatprep.subr.mxu0 %v719
    %1072 = vmatpush1.msra.mxu0 %v718
    %1073 = vmatprep.subr.mxu0 %v723
    %1074 = vmatpush1.msra.mxu0 %v722
    %1075 = vmatprep.subr.mxu0 %v727
    %1076 = vmatpush1.msra.mxu0 %v726
    %1077 = vmatprep.subr.mxu0 %v731
    %1078 = vmatpush1.msra.mxu0 %v730
    %1079 = vmatprep.subr.mxu0 %v735
    %1080 = vmatpush1.msra.mxu0 %v734
    %1081 = vmatprep.subr.mxu0 %v739
    %1082 = vmatpush1.msra.mxu0 %v738
    %1083 = vmatprep.subr.mxu0 %v743
    %1084 = vmatpush1.msra.mxu0 %v742
    %1085 = vmatprep.subr.mxu0 %v747
    %1086 = vmatpush1.msra.mxu0 %v746
    %1087 = vmatprep.subr.mxu0 %v751
    %1088 = vmatpush1.msra.mxu0 %v750
    %1089 = vmatprep.subr.mxu0 %v755
    %1090 = vmatpush1.msra.mxu0 %v754
    %1091 = vmatprep.subr.mxu0 %v759
    %1092 = vmatpush1.msra.mxu0 %v758
    %1093 = vmatprep.subr.mxu0 %v763
    %1094 = vmatpush1.msra.mxu0 %v762
    %1095 = vmatprep.subr.mxu0 %v767
    %1096 = vmatpush1.msra.mxu0 %v766
    %1097 = vmatprep.subr.mxu0 %v771
    %1098 = vmatpush1.msra.mxu0 %v770
    %1099 = vmatprep.subr.mxu0 %v775
    %1100 = vmatpush1.msra.mxu0 %v774
    %1101 = vmatprep.subr.mxu0 %v779
    %1102 = vmatpush1.msra.mxu0 %v778
    %1103 = vmatprep.subr.mxu0 %v783
    %1104 = vmatpush1.msra.mxu0 %v782
    %1105 = vmatprep.mubr.f32.mxu0 %v823
    %1106 = vmatmul.mubr.f32.gmra.mrb[0].mxu0 %v821
    %v1107 = vpop.f32.mrb[0].mxu0
    %v1108 = vadd.f32 %v1037, %v1107
    %v1109 = vpop.f32.mrb[0].mxu0
    %v1110 = vadd.f32 %v1039, %v1109
    %1111 = vdwg.mxu0
    %v1112 = vmul.f32 %v224, %v453
    %v1113 = vmul.f32 %v224, %v455
    %v1114 = vmul.f32 %v224, %v524
    %v1115 = vmul.f32 %v224, %v526
    %v1116 = vmul.f32 %v223, %v966
    %v1117 = vmul.f32 %v223, %v968
    %v1118 = vmul.f32 %v223, %v1108
    %v1119 = vmul.f32 %v223, %v1110
    %v1120 = vadd.f32 %v1112, %v1116
    %v1121 = vadd.f32 %v1113, %v1117
    %v1122 = vadd.f32 %v1114, %v1118
    %v1123 = vadd.f32 %v1115, %v1119
    %v1128 = vcombine.low %v1120, %v1121
    %v1129 = vcombine.low %v1122, %v1123
    %v1131 = vunpack.c.l.s4 1983009808
    %v1132 = vunpack.c.0.s8 %v1131
    %v1133 = vlaneseq
    %v1134 = vshrl.u32 %v1133, 7
    %v1135 = vsub.s32 %v1132, %v1134
    %v1136 = vrot.slane %v1128, %v1135
    %v1138 = vunpack.c.l.s4 1983009808
    %v1139 = vunpack.c.0.s8 %v1138
    %v1140 = vlaneseq
    %v1141 = vshrl.u32 %v1140, 7
    %v1142 = vsub.s32 %v1139, %v1141
    %v1143 = vrot.slane %v1129, %v1142
    %v1144 = vcombine.low %v1136, %v1143
    %1146 = vst [vmem:[#allocation3] sm:$0xff] %v1144
    // Predicated region
    $region38: #{audio_visual_forward.1} parent=1 // pred_check
      _
    $region39: #{audio_visual_forward.1} parent=1 // pred_check_branch
      %1148 = sbr.rel (0) target = $region41
    $region40: #{audio_visual_forward.1} parent=1 // pred_region
      %s1150 = ssub.s32 128, 128
      %1151 = vsyncadd [#allocation4], %s1150
      %s1153 = sshll.u32 [#allocation3], 4
      %s1154 = int_to_ptr.vmem [resolvable:$true] %s1153
      %1156 = dma.vmem_to_hbm [thread:$0]  %s1154, 128, %s9, [#allocation4]
    $region41: #{audio_visual_forward.1} parent=1 // pred_fallthru
      _
    // Predicated region
    $region42: #{audio_visual_forward.1} parent=1 // pred_check
      _
    $region43: #{audio_visual_forward.1} parent=1 // pred_check_branch
      %1158 = sbr.rel (0) target = $region45
    $region44: #{audio_visual_forward.1} parent=1 // pred_region
      %1159 = dma.done [#allocation4], 128
    $region45: #{audio_visual_forward.1} parent=1 // pred_fallthru
      _
    %1160 = vsyncpa [#allocation4], 1

</llo_original>
